<compile_context>
chip_gen: v5e
topology: v5e:2x2
jax: 0.10.0
libtpu: 0.0.40
codegen_flags: <defaults>
</compile_context>

<pallas_src>
import functools

import jax
import jax.numpy as jnp
from jax.experimental import pallas as pl
from jax.experimental.pallas import tpu as pltpu

FILTER_SIZES = [3, 4, 5]
NUM_FILTERS = 100


def _round_up(x, m):
    return ((x + m - 1) // m) * m


def _pick_batch_tile(batch, lk):
    """Batch tile (multiple of 8): aim for ~512-2048 matmul rows per grid step
    and prefer >= 2 grid steps when the batch allows it (v7x megacore)."""
    target_rows = 1024
    target_tb = _round_up(max(1, target_rows // max(lk, 1)), 8)
    tb = min(_round_up(batch, 8), target_tb)
    if batch > 8 and _round_up(batch, tb) // tb < 2:
        tb = _round_up(-(-batch // 2), 8)          # ceil(batch/2), 8-aligned
    return max(tb, 8)


# ----------------------------------------------------------------------------
# Pallas kernel: fused conv(x3) -> bias+ReLU -> masked global max-pool -> dense
# ----------------------------------------------------------------------------
def kim_cnn_kernel(emb_ref,             # (TB, Lemb, E)      bf16
                   mask_ref,            # (Lk, 3*Fp)         f32  (broadcast)
                   wc_ref,              # (kmax*E, 3*Fp)     bf16 (fused conv w)
                   bc_ref,              # (1, 3*Fp)          f32  (fused conv b)
                   wd_ref,              # (3*Fp, Cp)         f32
                   bd_ref,              # (1, Cp)            f32
                   out_ref,             # (TB, Cp)           f32 (lane-dense)
                   *, kmax):
    emb = emb_ref[...]                                # bf16
    tb, l_emb, e = emb.shape
    lk, nfp = mask_ref.shape
    assert lk == l_emb - kmax + 1

    # im2col ONCE for the longest (kmax-tap) window; shorter filters live in
    # zero-padded tap rows of the fused weight.  Built in bf16.
    patches = jnp.concatenate(
        [emb[:, dk:dk + lk, :] for dk in range(kmax)], axis=-1)   # (TB, Lk, kmax*E)
    patches2d = patches.reshape(tb * lk, kmax * e)

    # Single fused conv-as-matmul on the MXU (bf16 in, f32 accumulate).
    s = jnp.dot(patches2d, wc_ref[...],
                preferred_element_type=jnp.float32)               # (TB*Lk, 3*Fp)
    s = jnp.maximum(s + bc_ref[...], 0.0)                         # bias + ReLU
    # Zero positions past each branch's valid length (post-ReLU, so harmless).
    s = s.reshape(tb, lk, nfp) * mask_ref[...][None]

    pooled = jnp.max(s, axis=1)                                   # (TB, 3*Fp)

    logits = jnp.dot(pooled, wd_ref[...],
                     preferred_element_type=jnp.float32) + bd_ref[...]
    out_ref[...] = logits.astype(out_ref.dtype)                   # lane-dense store


# ----------------------------------------------------------------------------
# One-time parameter fusion / padding (static model parameters)
# ----------------------------------------------------------------------------
def prepare_cnn_static_params(embed_matrix, conv_ws, conv_bs, dense_w, dense_b):
    """Build fused, lane-padded, dtype-cast parameters ONCE at model init.

    embed_matrix: (V, E).  conv_ws[i]: (F, E, k_i) PyTorch Conv1d layout.
    conv_bs[i]: (F,).  dense_w: (C, 3F) PyTorch Linear layout.  dense_b: (C,).
    """
    filter_sizes = tuple(int(w.shape[-1]) for w in conv_ws)
    kmax = max(filter_sizes)
    n_br = len(filter_sizes)
    F = int(conv_ws[0].shape[0])
    C = int(dense_w.shape[0])
    E = int(embed_matrix.shape[1])
    FP = _round_up(F, 128)                      # 100 -> 128
    CP = _round_up(C, 128)                      # 4   -> 128
    NFP = n_br * FP

    # Frozen embedding ("from_pretrained") cast to bf16 once: the gather,
    # HBM->VMEM streaming and in-kernel im2col all run at half the bytes.
    embed_bf16 = jnp.asarray(embed_matrix, jnp.bfloat16)

    # Fused conv weight (kmax*E, 3*FP): row dk*E + c of branch i holds
    # conv_ws[i][f, c, dk]; missing taps and padded filter columns stay zero.
    wc = jnp.zeros((kmax * E, NFP), jnp.float32)
    bc = jnp.zeros((1, NFP), jnp.float32)
    for i, (w, b) in enumerate(zip(conv_ws, conv_bs)):
        k = int(w.shape[-1])
        w_flat = jnp.transpose(w, (2, 1, 0)).reshape(k * E, F).astype(jnp.float32)
        wc = wc.at[:k * E, i * FP:i * FP + F].set(w_flat)
        bc = bc.at[0, i * FP:i * FP + F].set(b.astype(jnp.float32))
    wc = wc.astype(jnp.bfloat16)

    # Dense weight/bias padded to lane-aligned shapes; padded rows/cols zero.
    wd = jnp.zeros((NFP, CP), jnp.float32)
    for i in range(n_br):
        wd = wd.at[i * FP:i * FP + F, :C].set(
            jnp.transpose(dense_w[:, i * F:(i + 1) * F]).astype(jnp.float32))
    bd = jnp.zeros((1, CP), jnp.float32).at[0, :C].set(dense_b.astype(jnp.float32))

    params = (embed_bf16, wc, bc, wd, bd)
    meta = dict(filter_sizes=filter_sizes, num_classes=C, f_pad=FP)
    return params, meta


# ----------------------------------------------------------------------------
# Jitted forward: embedding gather (glue) + mask build + pallas_call
# ----------------------------------------------------------------------------
@functools.partial(jax.jit, static_argnames=("filter_sizes", "num_classes"))
def cnn_static_forward(token_ids, embed_bf16, wc, bc, wd, bd,
                       *, filter_sizes, num_classes):
    filter_sizes = tuple(filter_sizes)
    kmin, kmax = min(filter_sizes), max(filter_sizes)
    n_br = len(filter_sizes)

    B, L = token_ids.shape
    E = int(embed_bf16.shape[1])
    NFP = int(wc.shape[1])
    FP = NFP // n_br
    CP = int(wd.shape[1])

    emb = embed_bf16[token_ids]                                   # (B, L, E) bf16

    # Pad the time axis so (a) kmax-tap windows exist at every pooled position
    # and (b) the pooled-position count is a multiple of 8 (tile-aligned M).
    lk_pad = _round_up(L - kmin + 1, 8)
    l_emb = lk_pad + kmax - 1

    # Batch tile: ~512-2048 matmul rows per grid step; pad B to a multiple.
    tb = _pick_batch_tile(B, lk_pad)
    b_pad = _round_up(B, tb)
    grid = (b_pad // tb,)

    emb_pad = jnp.pad(emb, ((0, b_pad - B), (0, l_emb - L), (0, 0)))

    # Grid-invariant validity mask, built once here (not per grid step).
    pos = jnp.arange(lk_pad, dtype=jnp.int32)[:, None]            # (Lk, 1)
    mask = jnp.concatenate(
        [jnp.broadcast_to((pos < (L - k + 1)).astype(jnp.float32), (lk_pad, FP))
         for k in filter_sizes], axis=-1)                         # (Lk, 3*FP)

    flops = 2 * b_pad * lk_pad * (kmax * E) * NFP + 2 * b_pad * NFP * CP
    bytes_accessed = int(2 * emb_pad.size + 4 * mask.size + 2 * wc.size
                         + 4 * (bc.size + wd.size + bd.size) + 4 * b_pad * CP)

    # Explicit VMEM budget (default scoped limit is only 16 MiB on v5e).
    weight_bytes = 2 * (wc.size * 2 + bc.size * 4 + wd.size * 4 + bd.size * 4
                        + mask.size * 4)                          # double-buffered
    io_bytes = 2 * (tb * l_emb * E * 2) + 2 * (tb * CP * 4)
    interm_bytes = tb * lk_pad * (kmax * E) * 2 + 2 * tb * lk_pad * NFP * 4
    vmem_limit = int(min(64 << 20, max(32 << 20,
                                       2 * (weight_bytes + io_bytes + interm_bytes))))

    kernel = functools.partial(kim_cnn_kernel, kmax=kmax)

    out = pl.pallas_call(
        kernel,
        out_shape=jax.ShapeDtypeStruct((b_pad, CP), jnp.float32),
        grid_spec=pltpu.PrefetchScalarGridSpec(
            num_scalar_prefetch=0,
            grid=grid,
            in_specs=[
                pl.BlockSpec((tb, l_emb, E), lambda b: (b, 0, 0)),     # streamed
                pl.BlockSpec((lk_pad, NFP), lambda b: (0, 0)),         # broadcast
                pl.BlockSpec((kmax * E, NFP), lambda b: (0, 0)),       # broadcast
                pl.BlockSpec((1, NFP), lambda b: (0, 0)),              # broadcast
                pl.BlockSpec((NFP, CP), lambda b: (0, 0)),             # broadcast
                pl.BlockSpec((1, CP), lambda b: (0, 0)),               # broadcast
            ],
            out_specs=pl.BlockSpec((tb, CP), lambda b: (b, 0)),
        ),
        compiler_params=pltpu.CompilerParams(
            dimension_semantics=("parallel",),
            vmem_limit_bytes=vmem_limit),
        cost_estimate=pl.CostEstimate(flops=flops, transcendentals=0,
                                      bytes_accessed=bytes_accessed),
    )(emb_pad, mask, wc, bc, wd, bd)

    return out[:B, :num_classes]                                  # (B, C)


# ----------------------------------------------------------------------------
# Pure-JAX reference (independent einsum path, all f32)
# ----------------------------------------------------------------------------
def cnn_static_reference(token_ids, embed_matrix, conv_ws, conv_bs, dense_w, dense_b):
    emb = embed_matrix[token_ids].astype(jnp.float32)             # (B, L, E)
    B, L, E = emb.shape
    feats = []
    for w, b in zip(conv_ws, conv_bs):
        k = int(w.shape[-1])
        lk = L - k + 1
        patches = jnp.stack([emb[:, dk:dk + lk, :] for dk in range(k)],
                            axis=-1)                              # (B, lk, E, k)
        y = jnp.einsum("blek,fek->bfl", patches,
                       w.astype(jnp.float32)) + b[None, :, None]  # (B, F, lk)
        y = jnp.maximum(y, 0.0)
        feats.append(jnp.max(y, axis=-1))                         # (B, F)
    cat = jnp.concatenate(feats, axis=-1)                         # (B, 3F)
    return cat @ dense_w.T + dense_b[None, :]                     # (B, C)


# ----------------------------------------------------------------------------
if __name__ == "__main__":
    B, MAXLEN, EMBEDDIM, NUMCLASSES, VOCAB = 2, 16, 32, 4, 50

    key = jax.random.PRNGKey(0)
    k_emb, k_x, k_w1, k_b1, k_w2, k_b2, k_w3, k_b3, k_wd, k_bd = jax.random.split(key, 10)

    embed_matrix = jax.random.normal(k_emb, (VOCAB, EMBEDDIM), jnp.float32) * 0.1
    token_ids = jax.random.randint(k_x, (B, MAXLEN), 0, VOCAB, dtype=jnp.int32)

    conv_ws, conv_bs = [], []
    for ks, kw, kb in zip(FILTER_SIZES, (k_w1, k_w2, k_w3), (k_b1, k_b2, k_b3)):
        conv_ws.append(jax.random.normal(kw, (NUM_FILTERS, EMBEDDIM, ks), jnp.float32) * 0.05)
        conv_bs.append(jax.random.normal(kb, (NUM_FILTERS,), jnp.float32) * 0.05)

    dense_w = jax.random.normal(k_wd, (NUMCLASSES, 3 * NUM_FILTERS), jnp.float32) * 0.05
    dense_b = jax.random.normal(k_bd, (NUMCLASSES,), jnp.float32) * 0.05

    # One-time parameter fusion/padding (model init), then the jitted forward.
    params, meta = prepare_cnn_static_params(embed_matrix, conv_ws, conv_bs,
                                             dense_w, dense_b)
    out = cnn_static_forward(token_ids, *params,
                             filter_sizes=meta["filter_sizes"],
                             num_classes=meta["num_classes"])
    out = jax.block_until_ready(out)

    ref = cnn_static_reference(token_ids, embed_matrix, conv_ws, conv_bs,
                               dense_w, dense_b)
    assert out.shape == (B, NUMCLASSES), out.shape
    # Embedding + conv matmul run in bf16 (f32 accumulation) -> tolerance ~2e-2.
    assert jnp.allclose(out, ref, atol=2e-2, rtol=2e-2), (out, ref)

    print("KERNEL_OK")
</pallas_src>

<mosaic_0001>
module attributes {stable_mosaic.version = 11 : i64} {
  func.func @kim_cnn_kernel(%arg0: i32, %arg1: memref<8x20x32xbf16, #tpu.memory_space<vmem>>, %arg2: memref<16x384xf32, #tpu.memory_space<vmem>>, %arg3: memref<160x384xbf16, #tpu.memory_space<vmem>>, %arg4: memref<1x384xf32, #tpu.memory_space<vmem>>, %arg5: memref<384x128xf32, #tpu.memory_space<vmem>>, %arg6: memref<1x128xf32, #tpu.memory_space<vmem>>, %arg7: memref<8x128xf32, #tpu.memory_space<vmem>>) attributes {dimension_semantics = [#tpu.dimension_semantics<parallel>], iteration_bounds = array<i64: 1>, scalar_prefetch = 0 : i64, scratch_operands = 0 : i64, tpu.core_type = #tpu.core_type<tc>, window_params = [{transform_indices = @transform_0, window_bounds = array<i64: 8, 20, 32>}, {pipeline_mode = #tpu.pipeline_mode<synchronous>, transform_indices = @transform_1, window_bounds = array<i64: 16, 384>}, {pipeline_mode = #tpu.pipeline_mode<synchronous>, transform_indices = @transform_2, window_bounds = array<i64: 160, 384>}, {pipeline_mode = #tpu.pipeline_mode<synchronous>, transform_indices = @transform_3, window_bounds = array<i64: 1, 384>}, {pipeline_mode = #tpu.pipeline_mode<synchronous>, transform_indices = @transform_4, window_bounds = array<i64: 384, 128>}, {pipeline_mode = #tpu.pipeline_mode<synchronous>, transform_indices = @transform_5, window_bounds = array<i64: 1, 128>}, {transform_indices = @transform_6, window_bounds = array<i64: 8, 128>}]} {
    %c0 = arith.constant 0 : index
    %c0_0 = arith.constant 0 : index
    %c0_1 = arith.constant 0 : index
    %0 = vector.load %arg1[%c0, %c0_0, %c0_1] : memref<8x20x32xbf16, #tpu.memory_space<vmem>>, vector<8x20x32xbf16>
    %1 = vector.extract_strided_slice %0 {offsets = [0, 0, 0], sizes = [8, 16, 32], strides = [1, 1, 1]} : vector<8x20x32xbf16> to vector<8x16x32xbf16>
    %2 = vector.extract_strided_slice %0 {offsets = [0, 1, 0], sizes = [8, 16, 32], strides = [1, 1, 1]} : vector<8x20x32xbf16> to vector<8x16x32xbf16>
    %3 = vector.extract_strided_slice %0 {offsets = [0, 2, 0], sizes = [8, 16, 32], strides = [1, 1, 1]} : vector<8x20x32xbf16> to vector<8x16x32xbf16>
    %4 = vector.extract_strided_slice %0 {offsets = [0, 3, 0], sizes = [8, 16, 32], strides = [1, 1, 1]} : vector<8x20x32xbf16> to vector<8x16x32xbf16>
    %5 = vector.extract_strided_slice %0 {offsets = [0, 4, 0], sizes = [8, 16, 32], strides = [1, 1, 1]} : vector<8x20x32xbf16> to vector<8x16x32xbf16>
    %6 = tpu.concatenate %1, %2, %3, %4, %5 in 2 : vector<8x16x32xbf16>, vector<8x16x32xbf16>, vector<8x16x32xbf16>, vector<8x16x32xbf16>, vector<8x16x32xbf16> -> vector<8x16x160xbf16>
    %7 = vector.shape_cast %6 : vector<8x16x160xbf16> to vector<128x160xbf16>
    %c0_2 = arith.constant 0 : index
    %c0_3 = arith.constant 0 : index
    %8 = vector.load %arg3[%c0_2, %c0_3] : memref<160x384xbf16, #tpu.memory_space<vmem>>, vector<160x384xbf16>
    %cst = arith.constant dense<0.000000e+00> : vector<128x384xf32>
    %9 = tpu.matmul %7, %8, %cst {dimension_numbers = #tpu.dot_dimension_numbers<[1], [0], [0], [1], [0, 0, 1, 1], [], []>} : vector<128x160xbf16>, vector<160x384xbf16>, vector<128x384xf32> -> vector<128x384xf32>
    %c0_4 = arith.constant 0 : index
    %c0_5 = arith.constant 0 : index
    %10 = vector.load %arg4[%c0_4, %c0_5] : memref<1x384xf32, #tpu.memory_space<vmem>>, vector<1x384xf32>
    %11 = vector.broadcast %10 : vector<1x384xf32> to vector<128x384xf32>
    %12 = arith.addf %9, %11 : vector<128x384xf32>
    %cst_6 = arith.constant 0.000000e+00 : f32
    %13 = vector.broadcast %cst_6 : f32 to vector<128x384xf32>
    %14 = arith.maximumf %12, %13 : vector<128x384xf32>
    %15 = vector.shape_cast %14 : vector<128x384xf32> to vector<8x16x384xf32>
    %c0_7 = arith.constant 0 : index
    %c0_8 = arith.constant 0 : index
    %16 = vector.load %arg2[%c0_7, %c0_8] : memref<16x384xf32, #tpu.memory_space<vmem>>, vector<16x384xf32>
    %17 = vector.shape_cast %16 : vector<16x384xf32> to vector<1x16x384xf32>
    %18 = vector.broadcast %17 : vector<1x16x384xf32> to vector<8x16x384xf32>
    %19 = arith.mulf %15, %18 : vector<8x16x384xf32>
    %cst_9 = arith.constant dense<0xFF800000> : vector<8x384xf32>
    %20 = vector.multi_reduction <maximumf>, %19, %cst_9 [1] : vector<8x16x384xf32> to vector<8x384xf32>
    %c0_10 = arith.constant 0 : index
    %c0_11 = arith.constant 0 : index
    %21 = vector.load %arg5[%c0_10, %c0_11] : memref<384x128xf32, #tpu.memory_space<vmem>>, vector<384x128xf32>
    %cst_12 = arith.constant dense<0.000000e+00> : vector<8x128xf32>
    %22 = tpu.matmul %20, %21, %cst_12 {dimension_numbers = #tpu.dot_dimension_numbers<[1], [0], [0], [1], [0, 0, 1, 1], [], []>} : vector<8x384xf32>, vector<384x128xf32>, vector<8x128xf32> -> vector<8x128xf32>
    %c0_13 = arith.constant 0 : index
    %c0_14 = arith.constant 0 : index
    %23 = vector.load %arg6[%c0_13, %c0_14] : memref<1x128xf32, #tpu.memory_space<vmem>>, vector<1x128xf32>
    %24 = vector.broadcast %23 : vector<1x128xf32> to vector<8x128xf32>
    %25 = arith.addf %22, %24 : vector<8x128xf32>
    %c0_15 = arith.constant 0 : index
    %c0_16 = arith.constant 0 : index
    %26 = vector.load %arg7[%c0_15, %c0_16] : memref<8x128xf32, #tpu.memory_space<vmem>>, vector<8x128xf32>
    tpu.vector_store %arg7[%c0_15, %c0_16], %25 {strides = array<i32>} : memref<8x128xf32, #tpu.memory_space<vmem>>, vector<8x128xf32>,
    return
  }
  func.func @transform_0(%arg0: i32) -> (i32, i32, i32) {
    %c0_i32 = arith.constant 0 : i32
    %c0_i32_0 = arith.constant 0 : i32
    %c0_i32_1 = arith.constant 0 : i32
    return %arg0, %c0_i32, %c0_i32_0 : i32, i32, i32
  }
  func.func @transform_1(%arg0: i32) -> (i32, i32) {
    %c0_i32 = arith.constant 0 : i32
    %c0_i32_0 = arith.constant 0 : i32
    %c0_i32_1 = arith.constant 0 : i32
    return %c0_i32, %c0_i32_0 : i32, i32
  }
  func.func @transform_2(%arg0: i32) -> (i32, i32) {
    %c0_i32 = arith.constant 0 : i32
    %c0_i32_0 = arith.constant 0 : i32
    %c0_i32_1 = arith.constant 0 : i32
    return %c0_i32, %c0_i32_0 : i32, i32
  }
  func.func @transform_3(%arg0: i32) -> (i32, i32) {
    %c0_i32 = arith.constant 0 : i32
    %c0_i32_0 = arith.constant 0 : i32
    %c0_i32_1 = arith.constant 0 : i32
    return %c0_i32, %c0_i32_0 : i32, i32
  }
  func.func @transform_4(%arg0: i32) -> (i32, i32) {
    %c0_i32 = arith.constant 0 : i32
    %c0_i32_0 = arith.constant 0 : i32
    %c0_i32_1 = arith.constant 0 : i32
    return %c0_i32, %c0_i32_0 : i32, i32
  }
  func.func @transform_5(%arg0: i32) -> (i32, i32) {
    %c0_i32 = arith.constant 0 : i32
    %c0_i32_0 = arith.constant 0 : i32
    %c0_i32_1 = arith.constant 0 : i32
    return %c0_i32, %c0_i32_0 : i32, i32
  }
  func.func @transform_6(%arg0: i32) -> (i32, i32) {
    %c0_i32 = arith.constant 0 : i32
    %c0_i32_0 = arith.constant 0 : i32
    return %arg0, %c0_i32 : i32, i32
  }
}

</mosaic_0001>

<llo_original>
// kernel: cnn_static_forward.1
$region0: #{cnn_static_forward.1}
  #allocation0 [shape = 'u32[]', space=smem, size = 0x4, offset = 0x4, fixed_abs, tag = 'smem constant byte address 0x4 - core index']
  #allocation1 [shape = 'u32[72,128]{1,0:T(1,128)}', space=vmem, size = 0x9000, scoped, tag = 'internal scratch']
  %s0 = inlined_call_operand.vmem [shape: bf16[8,20,32], index: 0, kind: input, shape index: {}]
  %s1 = inlined_call_operand.vmem [shape: f32[16,384], index: 1, kind: input, shape index: {}]
  %s2 = inlined_call_operand.hbm [shape: bf16[160,384], index: 2, kind: input, shape index: {}]
  %s3 = inlined_call_operand.vmem [shape: f32[1,384], index: 3, kind: input, shape index: {}]
  %s4 = inlined_call_operand.vmem [shape: f32[384,128], index: 4, kind: input, shape index: {}]
  %s5 = inlined_call_operand.vmem [shape: f32[1,128], index: 5, kind: input, shape index: {}]
  %s6 = inlined_call_operand.vmem [shape: f32[8,128], index: 6, kind: output, shape index: {}]
  %s7 = sld [smem:[#allocation0]]
  $region38: #{cnn_static_forward.1} parent=0
    _
  %s9 = ssub.s32 1, %s7
  %s10 = scalar_select 0, %s9, %s7
  $region1: #{cnn_static_forward.1} parent=0
    #allocation2 [shape = 'u8[122880]{0}', space=vmem, size = 0x1e000, scoped, tag = 'input window, operand 2, single buffered']
    #allocation3 [shape = 's32[1]{0}', space=sflag, size = 0x4, scoped, tag = 'scoped memory for cnn_static_forward.1']
    %11 = vsyncpa [#allocation3], 0
    // Predicated region
    $region2: #{cnn_static_forward.1} parent=1 // pred_check
      _
    $region3: #{cnn_static_forward.1} parent=1 // pred_check_branch
      %13 = sbr.rel (0) target = $region5
    $region4: #{cnn_static_forward.1} parent=1 // pred_region
      _
    $region5: #{cnn_static_forward.1} parent=1 // pred_fallthru
      _
    // Predicated region
    $region6: #{cnn_static_forward.1} parent=1 // pred_check
      _
    $region7: #{cnn_static_forward.1} parent=1 // pred_check_branch
      %15 = sbr.rel (0) target = $region9
    $region8: #{cnn_static_forward.1} parent=1 // pred_region
      _
    $region9: #{cnn_static_forward.1} parent=1 // pred_fallthru
      _
    // Predicated region
    $region10: #{cnn_static_forward.1} parent=1 // pred_check
      _
    $region11: #{cnn_static_forward.1} parent=1 // pred_check_branch
      %17 = sbr.rel (0) target = $region13
    $region12: #{cnn_static_forward.1} parent=1 // pred_region
      %19 = vsyncadd [#allocation3], 0
      %s20 = sshll.u32 %s2, 4
      %s21 = int_to_ptr.hbm [resolvable:$true] %s20
      %s22 = sshll.u32 [#allocation2], 4
      %s23 = int_to_ptr.vmem [resolvable:$true] %s22
      %28 = dma.hbm_to_vmem [thread:$0]  %s21, 3840, %s23, [#allocation3], 192, 192, 12
    $region13: #{cnn_static_forward.1} parent=1 // pred_fallthru
      _
    // Predicated region
    $region14: #{cnn_static_forward.1} parent=1 // pred_check
      _
    $region15: #{cnn_static_forward.1} parent=1 // pred_check_branch
      %30 = sbr.rel (0) target = $region17
    $region16: #{cnn_static_forward.1} parent=1 // pred_region
      _
    $region17: #{cnn_static_forward.1} parent=1 // pred_fallthru
      _
    // Predicated region
    $region18: #{cnn_static_forward.1} parent=1 // pred_check
      _
    $region19: #{cnn_static_forward.1} parent=1 // pred_check_branch
      %32 = sbr.rel (0) target = $region21
    $region20: #{cnn_static_forward.1} parent=1 // pred_region
      _
    $region21: #{cnn_static_forward.1} parent=1 // pred_fallthru
      _
    // Predicated region
    $region22: #{cnn_static_forward.1} parent=1 // pred_check
      _
    $region23: #{cnn_static_forward.1} parent=1 // pred_check_branch
      %34 = sbr.rel (0) target = $region25
    $region24: #{cnn_static_forward.1} parent=1 // pred_region
      _
    $region25: #{cnn_static_forward.1} parent=1 // pred_fallthru
      _
    // Predicated region
    $region26: #{cnn_static_forward.1} parent=1 // pred_check
      _
    $region27: #{cnn_static_forward.1} parent=1 // pred_check_branch
      %36 = sbr.rel (0) target = $region29
    $region28: #{cnn_static_forward.1} parent=1 // pred_region
      %38 = dma.done [#allocation3], 3840
    $region29: #{cnn_static_forward.1} parent=1 // pred_fallthru
      _
    %v40 = vld [vmem:[%s0] sm:$0xf]
    %v41 = vld [vmem:[%s0 + $0x4] sm:$0xf]
    %v42 = vld [vmem:[%s0 + $0x8] sm:$0x3]
    %v43 = vld [vmem:[%s0 + $0xc] sm:$0xf]
    %v44 = vld [vmem:[%s0 + $0x10] sm:$0xf]
    %v45 = vld [vmem:[%s0 + $0x14] sm:$0x3]
    %v46 = vld [vmem:[%s0 + $0x18] sm:$0xf]
    %v47 = vld [vmem:[%s0 + $0x1c] sm:$0xf]
    %v48 = vld [vmem:[%s0 + $0x20] sm:$0x3]
    %v49 = vld [vmem:[%s0 + $0x24] sm:$0xf]
    %v50 = vld [vmem:[%s0 + $0x28] sm:$0xf]
    %v51 = vld [vmem:[%s0 + $0x2c] sm:$0x3]
    %v52 = vld [vmem:[%s0 + $0x30] sm:$0xf]
    %v53 = vld [vmem:[%s0 + $0x34] sm:$0xf]
    %v54 = vld [vmem:[%s0 + $0x38] sm:$0x3]
    %v55 = vld [vmem:[%s0 + $0x3c] sm:$0xf]
    %v56 = vld [vmem:[%s0 + $0x40] sm:$0xf]
    %v57 = vld [vmem:[%s0 + $0x44] sm:$0x3]
    %v58 = vld [vmem:[%s0 + $0x48] sm:$0xf]
    %v59 = vld [vmem:[%s0 + $0x4c] sm:$0xf]
    %v60 = vld [vmem:[%s0 + $0x50] sm:$0x3]
    %v61 = vld [vmem:[%s0 + $0x54] sm:$0xf]
    %v62 = vld [vmem:[%s0 + $0x58] sm:$0xf]
    %v63 = vld [vmem:[%s0 + $0x5c] sm:$0x3]
    %v80 = vunpack.c.l.b16 %v40
    %v81 = vunpack.c.l.b16 %v41
    %v82 = vunpack.c.l.b16 %v43
    %v83 = vunpack.c.l.b16 %v44
    %v84 = vunpack.c.l.b16 %v46
    %v85 = vunpack.c.l.b16 %v47
    %v86 = vunpack.c.l.b16 %v49
    %v87 = vunpack.c.l.b16 %v50
    %v88 = vunpack.c.l.b16 %v52
    %v89 = vunpack.c.l.b16 %v53
    %v90 = vunpack.c.l.b16 %v55
    %v91 = vunpack.c.l.b16 %v56
    %v92 = vunpack.c.l.b16 %v58
    %v93 = vunpack.c.l.b16 %v59
    %v94 = vunpack.c.l.b16 %v61
    %v95 = vunpack.c.l.b16 %v62
    %v96 = vpack.c.b16 %v81, %v80
    %v97 = vpack.c.b16 %v83, %v82
    %v98 = vpack.c.b16 %v85, %v84
    %v99 = vpack.c.b16 %v87, %v86
    %v100 = vpack.c.b16 %v89, %v88
    %v101 = vpack.c.b16 %v91, %v90
    %v102 = vpack.c.b16 %v93, %v92
    %v103 = vpack.c.b16 %v95, %v94
    %v112 = vunpack.c.l.b16 %v42
    %v113 = vunpack.c.l.b16 %v45
    %v114 = vunpack.c.l.b16 %v48
    %v115 = vunpack.c.l.b16 %v51
    %v116 = vunpack.c.l.b16 %v54
    %v117 = vunpack.c.l.b16 %v57
    %v118 = vunpack.c.l.b16 %v60
    %v119 = vunpack.c.l.b16 %v63
    %v120 = vpack.c.b16 %v112, %v112
    %v121 = vpack.c.b16 %v113, %v113
    %v122 = vpack.c.b16 %v114, %v114
    %v123 = vpack.c.b16 %v115, %v115
    %v124 = vpack.c.b16 %v116, %v116
    %v125 = vpack.c.b16 %v117, %v117
    %v126 = vpack.c.b16 %v118, %v118
    %v127 = vpack.c.b16 %v119, %v119
    %vm128 = vsmask.f32 7424
    %v130 = vshrl.u32 %v96, 16
    %v132 = vshll.u32 %v96, 16
    %v134 = vrot.slane %v132, 1
    %v135 = vor.u32 %v130, %v134
    %v137 = vshll.u32 %v120, 16
    %v139 = vrot.slane %v137, 1
    %v140 = vsel %vm128, %v135, %v139
    %v142 = vshrl.u32 %v97, 16
    %v144 = vshll.u32 %v97, 16
    %v146 = vrot.slane %v144, 1
    %v147 = vor.u32 %v142, %v146
    %v149 = vshll.u32 %v121, 16
    %v151 = vrot.slane %v149, 1
    %v152 = vsel %vm128, %v147, %v151
    %v154 = vshrl.u32 %v98, 16
    %v156 = vshll.u32 %v98, 16
    %v158 = vrot.slane %v156, 1
    %v159 = vor.u32 %v154, %v158
    %v161 = vshll.u32 %v122, 16
    %v163 = vrot.slane %v161, 1
    %v164 = vsel %vm128, %v159, %v163
    %v166 = vshrl.u32 %v99, 16
    %v168 = vshll.u32 %v99, 16
    %v170 = vrot.slane %v168, 1
    %v171 = vor.u32 %v166, %v170
    %v173 = vshll.u32 %v123, 16
    %v175 = vrot.slane %v173, 1
    %v176 = vsel %vm128, %v171, %v175
    %v178 = vshrl.u32 %v100, 16
    %v180 = vshll.u32 %v100, 16
    %v182 = vrot.slane %v180, 1
    %v183 = vor.u32 %v178, %v182
    %v185 = vshll.u32 %v124, 16
    %v187 = vrot.slane %v185, 1
    %v188 = vsel %vm128, %v183, %v187
    %v190 = vshrl.u32 %v101, 16
    %v192 = vshll.u32 %v101, 16
    %v194 = vrot.slane %v192, 1
    %v195 = vor.u32 %v190, %v194
    %v197 = vshll.u32 %v125, 16
    %v199 = vrot.slane %v197, 1
    %v200 = vsel %vm128, %v195, %v199
    %v202 = vshrl.u32 %v102, 16
    %v204 = vshll.u32 %v102, 16
    %v206 = vrot.slane %v204, 1
    %v207 = vor.u32 %v202, %v206
    %v209 = vshll.u32 %v126, 16
    %v211 = vrot.slane %v209, 1
    %v212 = vsel %vm128, %v207, %v211
    %v214 = vshrl.u32 %v103, 16
    %v216 = vshll.u32 %v103, 16
    %v218 = vrot.slane %v216, 1
    %v219 = vor.u32 %v214, %v218
    %v221 = vshll.u32 %v127, 16
    %v223 = vrot.slane %v221, 1
    %v224 = vsel %vm128, %v219, %v223
    %225 = vrot.lane.b32.xlu0 %v140, 32
    %v226 = vpop.permute.xlu0 %225
    %227 = vrot.lane.b32.xlu0 %v152, 32
    %v228 = vpop.permute.xlu0 %227
    %229 = vrot.lane.b32.xlu0 %v164, 32
    %v230 = vpop.permute.xlu0 %229
    %231 = vrot.lane.b32.xlu0 %v176, 32
    %v232 = vpop.permute.xlu0 %231
    %233 = vrot.lane.b32.xlu0 %v188, 32
    %v234 = vpop.permute.xlu0 %233
    %235 = vrot.lane.b32.xlu0 %v200, 32
    %v236 = vpop.permute.xlu0 %235
    %237 = vrot.lane.b32.xlu0 %v212, 32
    %v238 = vpop.permute.xlu0 %237
    %239 = vrot.lane.b32.xlu0 %v224, 32
    %v240 = vpop.permute.xlu0 %239
    %vm241 = vcmask 1046528
    %v242 = vrot.slane %v96, 1
    %v243 = vrot.slane %v120, 1
    %v244 = vsel %vm241, %v242, %v243
    %v245 = vrot.slane %v97, 1
    %v246 = vrot.slane %v121, 1
    %v247 = vsel %vm241, %v245, %v246
    %v248 = vrot.slane %v98, 1
    %v249 = vrot.slane %v122, 1
    %v250 = vsel %vm241, %v248, %v249
    %v251 = vrot.slane %v99, 1
    %v252 = vrot.slane %v123, 1
    %v253 = vsel %vm241, %v251, %v252
    %v254 = vrot.slane %v100, 1
    %v255 = vrot.slane %v124, 1
    %v256 = vsel %vm241, %v254, %v255
    %v257 = vrot.slane %v101, 1
    %v258 = vrot.slane %v125, 1
    %v259 = vsel %vm241, %v257, %v258
    %v260 = vrot.slane %v102, 1
    %v261 = vrot.slane %v126, 1
    %v262 = vsel %vm241, %v260, %v261
    %v263 = vrot.slane %v103, 1
    %v264 = vrot.slane %v127, 1
    %v265 = vsel %vm241, %v263, %v264
    %266 = vrot.lane.b32.xlu0 %v244, 64
    %v267 = vpop.permute.xlu0 %266
    %268 = vrot.lane.b32.xlu0 %v247, 64
    %v269 = vpop.permute.xlu0 %268
    %270 = vrot.lane.b32.xlu0 %v250, 64
    %v271 = vpop.permute.xlu0 %270
    %272 = vrot.lane.b32.xlu0 %v253, 64
    %v273 = vpop.permute.xlu0 %272
    %274 = vrot.lane.b32.xlu0 %v256, 64
    %v275 = vpop.permute.xlu0 %274
    %276 = vrot.lane.b32.xlu0 %v259, 64
    %v277 = vpop.permute.xlu0 %276
    %278 = vrot.lane.b32.xlu0 %v262, 64
    %v279 = vpop.permute.xlu0 %278
    %280 = vrot.lane.b32.xlu0 %v265, 64
    %v281 = vpop.permute.xlu0 %280
    %vm282 = vsmask.f32 6400
    %v283 = vrot.slane %v130, 1
    %v284 = vrot.slane %v132, 2
    %v285 = vor.u32 %v283, %v284
    %v286 = vshrl.u32 %v120, 16
    %v288 = vrot.slane %v286, 1
    %v289 = vrot.slane %v137, 2
    %v290 = vor.u32 %v288, %v289
    %v291 = vsel %vm282, %v285, %v290
    %v292 = vrot.slane %v142, 1
    %v293 = vrot.slane %v144, 2
    %v294 = vor.u32 %v292, %v293
    %v295 = vshrl.u32 %v121, 16
    %v297 = vrot.slane %v295, 1
    %v298 = vrot.slane %v149, 2
    %v299 = vor.u32 %v297, %v298
    %v300 = vsel %vm282, %v294, %v299
    %v301 = vrot.slane %v154, 1
    %v302 = vrot.slane %v156, 2
    %v303 = vor.u32 %v301, %v302
    %v304 = vshrl.u32 %v122, 16
    %v306 = vrot.slane %v304, 1
    %v307 = vrot.slane %v161, 2
    %v308 = vor.u32 %v306, %v307
    %v309 = vsel %vm282, %v303, %v308
    %v310 = vrot.slane %v166, 1
    %v311 = vrot.slane %v168, 2
    %v312 = vor.u32 %v310, %v311
    %v313 = vshrl.u32 %v123, 16
    %v315 = vrot.slane %v313, 1
    %v316 = vrot.slane %v173, 2
    %v317 = vor.u32 %v315, %v316
    %v318 = vsel %vm282, %v312, %v317
    %v319 = vrot.slane %v178, 1
    %v320 = vrot.slane %v180, 2
    %v321 = vor.u32 %v319, %v320
    %v322 = vshrl.u32 %v124, 16
    %v324 = vrot.slane %v322, 1
    %v325 = vrot.slane %v185, 2
    %v326 = vor.u32 %v324, %v325
    %v327 = vsel %vm282, %v321, %v326
    %v328 = vrot.slane %v190, 1
    %v329 = vrot.slane %v192, 2
    %v330 = vor.u32 %v328, %v329
    %v331 = vshrl.u32 %v125, 16
    %v333 = vrot.slane %v331, 1
    %v334 = vrot.slane %v197, 2
    %v335 = vor.u32 %v333, %v334
    %v336 = vsel %vm282, %v330, %v335
    %v337 = vrot.slane %v202, 1
    %v338 = vrot.slane %v204, 2
    %v339 = vor.u32 %v337, %v338
    %v340 = vshrl.u32 %v126, 16
    %v342 = vrot.slane %v340, 1
    %v343 = vrot.slane %v209, 2
    %v344 = vor.u32 %v342, %v343
    %v345 = vsel %vm282, %v339, %v344
    %v346 = vrot.slane %v214, 1
    %v347 = vrot.slane %v216, 2
    %v348 = vor.u32 %v346, %v347
    %v349 = vshrl.u32 %v127, 16
    %v351 = vrot.slane %v349, 1
    %v352 = vrot.slane %v221, 2
    %v353 = vor.u32 %v351, %v352
    %v354 = vsel %vm282, %v348, %v353
    %355 = vrot.lane.b32.xlu0 %v291, 96
    %v356 = vpop.permute.xlu0 %355
    %357 = vrot.lane.b32.xlu0 %v300, 96
    %v358 = vpop.permute.xlu0 %357
    %359 = vrot.lane.b32.xlu0 %v309, 96
    %v360 = vpop.permute.xlu0 %359
    %361 = vrot.lane.b32.xlu0 %v318, 96
    %v362 = vpop.permute.xlu0 %361
    %363 = vrot.lane.b32.xlu0 %v327, 96
    %v364 = vpop.permute.xlu0 %363
    %365 = vrot.lane.b32.xlu0 %v336, 96
    %v366 = vpop.permute.xlu0 %365
    %367 = vrot.lane.b32.xlu0 %v345, 96
    %v368 = vpop.permute.xlu0 %367
    %369 = vrot.lane.b32.xlu0 %v354, 96
    %v370 = vpop.permute.xlu0 %369
    %vm371 = vcmask 1045504
    %v372 = vrot.slane %v96, 2
    %v373 = vrot.slane %v120, 2
    %v374 = vsel %vm371, %v372, %v373
    %v375 = vrot.slane %v97, 2
    %v376 = vrot.slane %v121, 2
    %v377 = vsel %vm371, %v375, %v376
    %v378 = vrot.slane %v98, 2
    %v379 = vrot.slane %v122, 2
    %v380 = vsel %vm371, %v378, %v379
    %v381 = vrot.slane %v99, 2
    %v382 = vrot.slane %v123, 2
    %v383 = vsel %vm371, %v381, %v382
    %v384 = vrot.slane %v100, 2
    %v385 = vrot.slane %v124, 2
    %v386 = vsel %vm371, %v384, %v385
    %v387 = vrot.slane %v101, 2
    %v388 = vrot.slane %v125, 2
    %v389 = vsel %vm371, %v387, %v388
    %v390 = vrot.slane %v102, 2
    %v391 = vrot.slane %v126, 2
    %v392 = vsel %vm371, %v390, %v391
    %v393 = vrot.slane %v103, 2
    %v394 = vrot.slane %v127, 2
    %v395 = vsel %vm371, %v393, %v394
    %vm396 = vcmask 261120
    %v398 = vsel %vm396, %v96, %v226
    %v400 = vsel %vm396, %v97, %v228
    %v402 = vsel %vm396, %v98, %v230
    %v404 = vsel %vm396, %v99, %v232
    %v406 = vsel %vm396, %v100, %v234
    %v408 = vsel %vm396, %v101, %v236
    %v410 = vsel %vm396, %v102, %v238
    %v412 = vsel %vm396, %v103, %v240
    %vm413 = vcmask 523264
    %v415 = vsel %vm413, %v398, %v267
    %v417 = vsel %vm413, %v400, %v269
    %v419 = vsel %vm413, %v402, %v271
    %v421 = vsel %vm413, %v404, %v273
    %v423 = vsel %vm413, %v406, %v275
    %v425 = vsel %vm413, %v408, %v277
    %v427 = vsel %vm413, %v410, %v279
    %v429 = vsel %vm413, %v412, %v281
    %vm430 = vcmask 785408
    %v432 = vsel %vm430, %v415, %v356
    %v435 = vsel %vm430, %v417, %v358
    %v438 = vsel %vm430, %v419, %v360
    %v441 = vsel %vm430, %v421, %v362
    %v444 = vsel %vm430, %v423, %v364
    %v447 = vsel %vm430, %v425, %v366
    %v450 = vsel %vm430, %v427, %v368
    %v453 = vsel %vm430, %v429, %v370
    %v455 = vld [vmem:[#allocation2] sm:$0xff]
    %v456 = vld [vmem:[#allocation2 + $0x8] sm:$0xf]
    %v457 = vld [vmem:[#allocation2 + $0xc] sm:$0xff]
    %v458 = vld [vmem:[#allocation2 + $0x14] sm:$0xf]
    %v459 = vld [vmem:[#allocation2 + $0x18] sm:$0xff]
    %v460 = vld [vmem:[#allocation2 + $0x20] sm:$0xf]
    %v461 = vld [vmem:[#allocation2 + $0x24] sm:$0xff]
    %v462 = vld [vmem:[#allocation2 + $0x2c] sm:$0xf]
    %v463 = vld [vmem:[#allocation2 + $0x30] sm:$0xff]
    %v464 = vld [vmem:[#allocation2 + $0x38] sm:$0xf]
    %v465 = vld [vmem:[#allocation2 + $0x3c] sm:$0xff]
    %v466 = vld [vmem:[#allocation2 + $0x44] sm:$0xf]
    %v467 = vld [vmem:[#allocation2 + $0x48] sm:$0xff]
    %v468 = vld [vmem:[#allocation2 + $0x50] sm:$0xf]
    %v469 = vld [vmem:[#allocation2 + $0x54] sm:$0xff]
    %v470 = vld [vmem:[#allocation2 + $0x5c] sm:$0xf]
    %v471 = vld [vmem:[#allocation2 + $0x60] sm:$0xff]
    %v472 = vld [vmem:[#allocation2 + $0x68] sm:$0xf]
    %v473 = vld [vmem:[#allocation2 + $0x6c] sm:$0xff]
    %v474 = vld [vmem:[#allocation2 + $0x74] sm:$0xf]
    %v475 = vld [vmem:[#allocation2 + $0x78] sm:$0xff]
    %v476 = vld [vmem:[#allocation2 + $0x80] sm:$0xf]
    %v477 = vld [vmem:[#allocation2 + $0x84] sm:$0xff]
    %v478 = vld [vmem:[#allocation2 + $0x8c] sm:$0xf]
    %v479 = vld [vmem:[#allocation2 + $0x90] sm:$0xff]
    %v480 = vld [vmem:[#allocation2 + $0x98] sm:$0xf]
    %v481 = vld [vmem:[#allocation2 + $0x9c] sm:$0xff]
    %v482 = vld [vmem:[#allocation2 + $0xa4] sm:$0xf]
    %v483 = vld [vmem:[#allocation2 + $0xa8] sm:$0xff]
    %v484 = vld [vmem:[#allocation2 + $0xb0] sm:$0xf]
    %v485 = vld [vmem:[#allocation2 + $0xb4] sm:$0xff]
    %v486 = vld [vmem:[#allocation2 + $0xbc] sm:$0xf]
    %v487 = vld [vmem:[#allocation2 + $0xc0] sm:$0xff]
    %v488 = vld [vmem:[#allocation2 + $0xc8] sm:$0xf]
    %v489 = vld [vmem:[#allocation2 + $0xcc] sm:$0xff]
    %v490 = vld [vmem:[#allocation2 + $0xd4] sm:$0xf]
    %v491 = vld [vmem:[#allocation2 + $0xd8] sm:$0xff]
    %v492 = vld [vmem:[#allocation2 + $0xe0] sm:$0xf]
    %v493 = vld [vmem:[#allocation2 + $0xe4] sm:$0xff]
    %v494 = vld [vmem:[#allocation2 + $0xec] sm:$0xf]
    %v495 = vld [vmem:[%s3] sm:$0x7]
    %v497 = vperm.slane %v495, 0
    %v498 = vperm.slane %v495, 1
    %v499 = vperm.slane %v495, 2
    %v543 = vunpack.c.l.b16 %v455
    %v544 = vunpack.c.h.b16 %v455
    %v545 = vunpack.c.l.b16 %v456
    %v546 = vunpack.c.l.b16 %v457
    %v547 = vunpack.c.h.b16 %v457
    %v548 = vunpack.c.l.b16 %v458
    %v549 = vunpack.c.l.b16 %v459
    %v550 = vunpack.c.h.b16 %v459
    %v551 = vunpack.c.l.b16 %v460
    %v552 = vunpack.c.l.b16 %v461
    %v553 = vunpack.c.h.b16 %v461
    %v554 = vunpack.c.l.b16 %v462
    %v555 = vunpack.c.l.b16 %v463
    %v556 = vunpack.c.h.b16 %v463
    %v557 = vunpack.c.l.b16 %v464
    %v558 = vunpack.c.l.b16 %v465
    %v559 = vunpack.c.h.b16 %v465
    %v560 = vunpack.c.l.b16 %v466
    %v561 = vunpack.c.l.b16 %v467
    %v562 = vunpack.c.h.b16 %v467
    %v563 = vunpack.c.l.b16 %v468
    %v564 = vunpack.c.l.b16 %v469
    %v565 = vunpack.c.h.b16 %v469
    %v566 = vunpack.c.l.b16 %v470
    %v567 = vunpack.c.l.b16 %v471
    %v568 = vunpack.c.h.b16 %v471
    %v569 = vunpack.c.l.b16 %v472
    %v570 = vunpack.c.l.b16 %v473
    %v571 = vunpack.c.h.b16 %v473
    %v572 = vunpack.c.l.b16 %v474
    %v573 = vunpack.c.l.b16 %v475
    %v574 = vunpack.c.h.b16 %v475
    %v575 = vunpack.c.l.b16 %v476
    %v576 = vunpack.c.l.b16 %v477
    %v577 = vunpack.c.h.b16 %v477
    %v578 = vunpack.c.l.b16 %v478
    %v579 = vunpack.c.l.b16 %v479
    %v580 = vunpack.c.h.b16 %v479
    %v581 = vunpack.c.l.b16 %v480
    %v582 = vunpack.c.l.b16 %v481
    %v583 = vunpack.c.h.b16 %v481
    %v584 = vunpack.c.l.b16 %v482
    %v585 = vunpack.c.l.b16 %v483
    %v586 = vunpack.c.h.b16 %v483
    %v587 = vunpack.c.l.b16 %v484
    %v588 = vunpack.c.l.b16 %v485
    %v589 = vunpack.c.h.b16 %v485
    %v590 = vunpack.c.l.b16 %v486
    %v591 = vunpack.c.l.b16 %v487
    %v592 = vunpack.c.h.b16 %v487
    %v593 = vunpack.c.l.b16 %v488
    %v594 = vunpack.c.l.b16 %v489
    %v595 = vunpack.c.h.b16 %v489
    %v596 = vunpack.c.l.b16 %v490
    %v597 = vunpack.c.l.b16 %v491
    %v598 = vunpack.c.h.b16 %v491
    %v599 = vunpack.c.l.b16 %v492
    %v600 = vunpack.c.l.b16 %v493
    %v601 = vunpack.c.h.b16 %v493
    %v602 = vunpack.c.l.b16 %v494
    %v603 = vpack.c.b16 %v546, %v543
    %v604 = vpack.c.b16 %v547, %v544
    %v605 = vpack.c.b16 %v548, %v545
    %v606 = vpack.c.b16 %v552, %v549
    %v607 = vpack.c.b16 %v553, %v550
    %v608 = vpack.c.b16 %v554, %v551
    %v609 = vpack.c.b16 %v558, %v555
    %v610 = vpack.c.b16 %v559, %v556
    %v611 = vpack.c.b16 %v560, %v557
    %v612 = vpack.c.b16 %v564, %v561
    %v613 = vpack.c.b16 %v565, %v562
    %v614 = vpack.c.b16 %v566, %v563
    %v615 = vpack.c.b16 %v570, %v567
    %v616 = vpack.c.b16 %v571, %v568
    %v617 = vpack.c.b16 %v572, %v569
    %v618 = vpack.c.b16 %v576, %v573
    %v619 = vpack.c.b16 %v577, %v574
    %v620 = vpack.c.b16 %v578, %v575
    %v621 = vpack.c.b16 %v582, %v579
    %v622 = vpack.c.b16 %v583, %v580
    %v623 = vpack.c.b16 %v584, %v581
    %v624 = vpack.c.b16 %v588, %v585
    %v625 = vpack.c.b16 %v589, %v586
    %v626 = vpack.c.b16 %v590, %v587
    %v627 = vpack.c.b16 %v594, %v591
    %v628 = vpack.c.b16 %v595, %v592
    %v629 = vpack.c.b16 %v596, %v593
    %v630 = vpack.c.b16 %v600, %v597
    %v631 = vpack.c.b16 %v601, %v598
    %v632 = vpack.c.b16 %v602, %v599
    %v664 = vsel %vm396, %v374, 0
    %v667 = vsel %vm396, %v377, 0
    %v670 = vsel %vm396, %v380, 0
    %v673 = vsel %vm396, %v383, 0
    %v676 = vsel %vm396, %v386, 0
    %v679 = vsel %vm396, %v389, 0
    %v682 = vsel %vm396, %v392, 0
    %v685 = vsel %vm396, %v395, 0
    %687 = vmatpush.bf16.msra.mxu0 %v624
    %688 = vmatpush.bf16.msra.mxu0 %v621
    %689 = vmatpush.bf16.msra.mxu0 %v618
    %690 = vmatpush.bf16.msra.mxu0 %v615
    %691 = vmatpush.bf16.msra.mxu0 %v612
    %692 = vmatpush.bf16.msra.mxu0 %v609
    %693 = vmatpush.bf16.msra.mxu0 %v606
    %694 = vmatpush.bf16.msra.mxu0 %v603
    %695 = vmatmul.bf16.gmra.mxu0 %v432
    %v696 = vpop.f32.mrf.mxu0
    %v697 = vadd.f32 %v497, %v696
    %v698 = vpop.f32.mrf.mxu0
    %v699 = vadd.f32 %v497, %v698
    %700 = vmatmul.bf16.gmra.mxu0 %v435
    %v701 = vpop.f32.mrf.mxu0
    %v702 = vadd.f32 %v497, %v701
    %v703 = vpop.f32.mrf.mxu0
    %v704 = vadd.f32 %v497, %v703
    %705 = vmatmul.bf16.gmra.mxu0 %v438
    %v706 = vpop.f32.mrf.mxu0
    %v707 = vadd.f32 %v497, %v706
    %v708 = vpop.f32.mrf.mxu0
    %v709 = vadd.f32 %v497, %v708
    %710 = vmatmul.bf16.gmra.mxu0 %v441
    %v711 = vpop.f32.mrf.mxu0
    %v712 = vadd.f32 %v497, %v711
    %v713 = vpop.f32.mrf.mxu0
    %v714 = vadd.f32 %v497, %v713
    %715 = vmatmul.bf16.gmra.mxu0 %v444
    %v716 = vpop.f32.mrf.mxu0
    %v717 = vadd.f32 %v497, %v716
    %v718 = vpop.f32.mrf.mxu0
    %v719 = vadd.f32 %v497, %v718
    %720 = vmatmul.bf16.gmra.mxu0 %v447
    %v721 = vpop.f32.mrf.mxu0
    %v722 = vadd.f32 %v497, %v721
    %v723 = vpop.f32.mrf.mxu0
    %v724 = vadd.f32 %v497, %v723
    %725 = vmatmul.bf16.gmra.mxu0 %v450
    %v726 = vpop.f32.mrf.mxu0
    %v727 = vadd.f32 %v497, %v726
    %v728 = vpop.f32.mrf.mxu0
    %v729 = vadd.f32 %v497, %v728
    %730 = vmatmul.bf16.gmra.mxu0 %v453
    %v731 = vpop.f32.mrf.mxu0
    %v732 = vadd.f32 %v497, %v731
    %v733 = vpop.f32.mrf.mxu0
    %v734 = vadd.f32 %v497, %v733
    %735 = vdwg.mxu0
    %736 = vmatpush.bf16.msra.mxu0 0
    %737 = vmatpush.bf16.msra.mxu0 0
    %738 = vmatpush.bf16.msra.mxu0 0
    %739 = vmatpush.bf16.msra.mxu0 0
    %740 = vmatpush.bf16.msra.mxu0 0
    %741 = vmatpush.bf16.msra.mxu0 0
    %742 = vmatpush.bf16.msra.mxu0 %v630
    %743 = vmatpush.bf16.msra.mxu0 %v627
    %744 = vmatmul.bf16.gmra.mxu0 %v664
    %v745 = vpop.f32.mrf.mxu0
    %v746 = vadd.f32 %v697, %v745
    %v747 = vpop.f32.mrf.mxu0
    %v748 = vadd.f32 %v699, %v747
    %749 = vmatmul.bf16.gmra.mxu0 %v667
    %v750 = vpop.f32.mrf.mxu0
    %v751 = vadd.f32 %v702, %v750
    %v752 = vpop.f32.mrf.mxu0
    %v753 = vadd.f32 %v704, %v752
    %754 = vmatmul.bf16.gmra.mxu0 %v670
    %v755 = vpop.f32.mrf.mxu0
    %v756 = vadd.f32 %v707, %v755
    %v757 = vpop.f32.mrf.mxu0
    %v758 = vadd.f32 %v709, %v757
    %759 = vmatmul.bf16.gmra.mxu0 %v673
    %v760 = vpop.f32.mrf.mxu0
    %v761 = vadd.f32 %v712, %v760
    %v762 = vpop.f32.mrf.mxu0
    %v763 = vadd.f32 %v714, %v762
    %764 = vmatmul.bf16.gmra.mxu0 %v676
    %v765 = vpop.f32.mrf.mxu0
    %v766 = vadd.f32 %v717, %v765
    %v767 = vpop.f32.mrf.mxu0
    %v768 = vadd.f32 %v719, %v767
    %769 = vmatmul.bf16.gmra.mxu0 %v679
    %v770 = vpop.f32.mrf.mxu0
    %v771 = vadd.f32 %v722, %v770
    %v772 = vpop.f32.mrf.mxu0
    %v773 = vadd.f32 %v724, %v772
    %774 = vmatmul.bf16.gmra.mxu0 %v682
    %v775 = vpop.f32.mrf.mxu0
    %v776 = vadd.f32 %v727, %v775
    %v777 = vpop.f32.mrf.mxu0
    %v778 = vadd.f32 %v729, %v777
    %779 = vmatmul.bf16.gmra.mxu0 %v685
    %v780 = vpop.f32.mrf.mxu0
    %v781 = vadd.f32 %v732, %v780
    %v782 = vpop.f32.mrf.mxu0
    %v783 = vadd.f32 %v734, %v782
    %784 = vdwg.mxu0
    %785 = vmatpush.bf16.msra.mxu0 %v625
    %786 = vmatpush.bf16.msra.mxu0 %v622
    %787 = vmatpush.bf16.msra.mxu0 %v619
    %788 = vmatpush.bf16.msra.mxu0 %v616
    %789 = vmatpush.bf16.msra.mxu0 %v613
    %790 = vmatpush.bf16.msra.mxu0 %v610
    %791 = vmatpush.bf16.msra.mxu0 %v607
    %792 = vmatpush.bf16.msra.mxu0 %v604
    %793 = vmatmul.bf16.gmra.mxu0 %v432
    %v794 = vpop.f32.mrf.mxu0
    %v795 = vadd.f32 %v498, %v794
    %v796 = vpop.f32.mrf.mxu0
    %v797 = vadd.f32 %v498, %v796
    %798 = vmatmul.bf16.gmra.mxu0 %v435
    %v799 = vpop.f32.mrf.mxu0
    %v800 = vadd.f32 %v498, %v799
    %v801 = vpop.f32.mrf.mxu0
    %v802 = vadd.f32 %v498, %v801
    %803 = vmatmul.bf16.gmra.mxu0 %v438
    %v804 = vpop.f32.mrf.mxu0
    %v805 = vadd.f32 %v498, %v804
    %v806 = vpop.f32.mrf.mxu0
    %v807 = vadd.f32 %v498, %v806
    %808 = vmatmul.bf16.gmra.mxu0 %v441
    %v809 = vpop.f32.mrf.mxu0
    %v810 = vadd.f32 %v498, %v809
    %v811 = vpop.f32.mrf.mxu0
    %v812 = vadd.f32 %v498, %v811
    %813 = vmatmul.bf16.gmra.mxu0 %v444
    %v814 = vpop.f32.mrf.mxu0
    %v815 = vadd.f32 %v498, %v814
    %v816 = vpop.f32.mrf.mxu0
    %v817 = vadd.f32 %v498, %v816
    %818 = vmatmul.bf16.gmra.mxu0 %v447
    %v819 = vpop.f32.mrf.mxu0
    %v820 = vadd.f32 %v498, %v819
    %v821 = vpop.f32.mrf.mxu0
    %v822 = vadd.f32 %v498, %v821
    %823 = vmatmul.bf16.gmra.mxu0 %v450
    %v824 = vpop.f32.mrf.mxu0
    %v825 = vadd.f32 %v498, %v824
    %v826 = vpop.f32.mrf.mxu0
    %v827 = vadd.f32 %v498, %v826
    %828 = vmatmul.bf16.gmra.mxu0 %v453
    %v829 = vpop.f32.mrf.mxu0
    %v830 = vadd.f32 %v498, %v829
    %v831 = vpop.f32.mrf.mxu0
    %v832 = vadd.f32 %v498, %v831
    %833 = vdwg.mxu0
    %834 = vmatpush.bf16.msra.mxu0 0
    %835 = vmatpush.bf16.msra.mxu0 0
    %836 = vmatpush.bf16.msra.mxu0 0
    %837 = vmatpush.bf16.msra.mxu0 0
    %838 = vmatpush.bf16.msra.mxu0 0
    %839 = vmatpush.bf16.msra.mxu0 0
    %840 = vmatpush.bf16.msra.mxu0 %v631
    %841 = vmatpush.bf16.msra.mxu0 %v628
    %842 = vmatmul.bf16.gmra.mxu0 %v664
    %v843 = vpop.f32.mrf.mxu0
    %v844 = vadd.f32 %v795, %v843
    %v845 = vpop.f32.mrf.mxu0
    %v846 = vadd.f32 %v797, %v845
    %847 = vmatmul.bf16.gmra.mxu0 %v667
    %v848 = vpop.f32.mrf.mxu0
    %v849 = vadd.f32 %v800, %v848
    %v850 = vpop.f32.mrf.mxu0
    %v851 = vadd.f32 %v802, %v850
    %852 = vmatmul.bf16.gmra.mxu0 %v670
    %v853 = vpop.f32.mrf.mxu0
    %v854 = vadd.f32 %v805, %v853
    %v855 = vpop.f32.mrf.mxu0
    %v856 = vadd.f32 %v807, %v855
    %857 = vmatmul.bf16.gmra.mxu0 %v673
    %v858 = vpop.f32.mrf.mxu0
    %v859 = vadd.f32 %v810, %v858
    %v860 = vpop.f32.mrf.mxu0
    %v861 = vadd.f32 %v812, %v860
    %862 = vmatmul.bf16.gmra.mxu0 %v676
    %v863 = vpop.f32.mrf.mxu0
    %v864 = vadd.f32 %v815, %v863
    %v865 = vpop.f32.mrf.mxu0
    %v866 = vadd.f32 %v817, %v865
    %867 = vmatmul.bf16.gmra.mxu0 %v679
    %v868 = vpop.f32.mrf.mxu0
    %v869 = vadd.f32 %v820, %v868
    %v870 = vpop.f32.mrf.mxu0
    %v871 = vadd.f32 %v822, %v870
    %872 = vmatmul.bf16.gmra.mxu0 %v682
    %v873 = vpop.f32.mrf.mxu0
    %v874 = vadd.f32 %v825, %v873
    %v875 = vpop.f32.mrf.mxu0
    %v876 = vadd.f32 %v827, %v875
    %877 = vmatmul.bf16.gmra.mxu0 %v685
    %v878 = vpop.f32.mrf.mxu0
    %v879 = vadd.f32 %v830, %v878
    %v880 = vpop.f32.mrf.mxu0
    %v881 = vadd.f32 %v832, %v880
    %882 = vdwg.mxu0
    %883 = vmatpush.bf16.msra.mxu0 %v626
    %884 = vmatpush.bf16.msra.mxu0 %v623
    %885 = vmatpush.bf16.msra.mxu0 %v620
    %886 = vmatpush.bf16.msra.mxu0 %v617
    %887 = vmatpush.bf16.msra.mxu0 %v614
    %888 = vmatpush.bf16.msra.mxu0 %v611
    %889 = vmatpush.bf16.msra.mxu0 %v608
    %890 = vmatpush.bf16.msra.mxu0 %v605
    %891 = vmatmul.bf16.gmra.mxu0 %v432
    %v892 = vpop.f32.mrf.mxu0
    %v893 = vadd.f32 %v499, %v892
    %v894 = vpop.f32.mrf.mxu0
    %v895 = vadd.f32 %v499, %v894
    %896 = vmatmul.bf16.gmra.mxu0 %v435
    %v897 = vpop.f32.mrf.mxu0
    %v898 = vadd.f32 %v499, %v897
    %v899 = vpop.f32.mrf.mxu0
    %v900 = vadd.f32 %v499, %v899
    %901 = vmatmul.bf16.gmra.mxu0 %v438
    %v902 = vpop.f32.mrf.mxu0
    %v903 = vadd.f32 %v499, %v902
    %v904 = vpop.f32.mrf.mxu0
    %v905 = vadd.f32 %v499, %v904
    %906 = vmatmul.bf16.gmra.mxu0 %v441
    %v907 = vpop.f32.mrf.mxu0
    %v908 = vadd.f32 %v499, %v907
    %v909 = vpop.f32.mrf.mxu0
    %v910 = vadd.f32 %v499, %v909
    %911 = vmatmul.bf16.gmra.mxu0 %v444
    %v912 = vpop.f32.mrf.mxu0
    %v913 = vadd.f32 %v499, %v912
    %v914 = vpop.f32.mrf.mxu0
    %v915 = vadd.f32 %v499, %v914
    %916 = vmatmul.bf16.gmra.mxu0 %v447
    %v917 = vpop.f32.mrf.mxu0
    %v918 = vadd.f32 %v499, %v917
    %v919 = vpop.f32.mrf.mxu0
    %v920 = vadd.f32 %v499, %v919
    %921 = vmatmul.bf16.gmra.mxu0 %v450
    %v922 = vpop.f32.mrf.mxu0
    %v923 = vadd.f32 %v499, %v922
    %v924 = vpop.f32.mrf.mxu0
    %v925 = vadd.f32 %v499, %v924
    %926 = vmatmul.bf16.gmra.mxu0 %v453
    %v927 = vpop.f32.mrf.mxu0
    %v928 = vadd.f32 %v499, %v927
    %v929 = vpop.f32.mrf.mxu0
    %v930 = vadd.f32 %v499, %v929
    %931 = vdwg.mxu0
    %932 = vmatpush.bf16.msra.mxu0 0
    %933 = vmatpush.bf16.msra.mxu0 0
    %934 = vmatpush.bf16.msra.mxu0 0
    %935 = vmatpush.bf16.msra.mxu0 0
    %936 = vmatpush.bf16.msra.mxu0 0
    %937 = vmatpush.bf16.msra.mxu0 0
    %938 = vmatpush.bf16.msra.mxu0 %v632
    %939 = vmatpush.bf16.msra.mxu0 %v629
    %940 = vmatmul.bf16.gmra.mxu0 %v664
    %v941 = vpop.f32.mrf.mxu0
    %v942 = vadd.f32 %v893, %v941
    %v943 = vpop.f32.mrf.mxu0
    %v944 = vadd.f32 %v895, %v943
    %945 = vmatmul.bf16.gmra.mxu0 %v667
    %v946 = vpop.f32.mrf.mxu0
    %v947 = vadd.f32 %v898, %v946
    %v948 = vpop.f32.mrf.mxu0
    %v949 = vadd.f32 %v900, %v948
    %950 = vmatmul.bf16.gmra.mxu0 %v670
    %v951 = vpop.f32.mrf.mxu0
    %v952 = vadd.f32 %v903, %v951
    %v953 = vpop.f32.mrf.mxu0
    %v954 = vadd.f32 %v905, %v953
    %955 = vmatmul.bf16.gmra.mxu0 %v673
    %v956 = vpop.f32.mrf.mxu0
    %v957 = vadd.f32 %v908, %v956
    %v958 = vpop.f32.mrf.mxu0
    %v959 = vadd.f32 %v910, %v958
    %960 = vmatmul.bf16.gmra.mxu0 %v676
    %v961 = vpop.f32.mrf.mxu0
    %v962 = vadd.f32 %v913, %v961
    %v963 = vpop.f32.mrf.mxu0
    %v964 = vadd.f32 %v915, %v963
    %965 = vmatmul.bf16.gmra.mxu0 %v679
    %v966 = vpop.f32.mrf.mxu0
    %v967 = vadd.f32 %v918, %v966
    %v968 = vpop.f32.mrf.mxu0
    %v969 = vadd.f32 %v920, %v968
    %970 = vmatmul.bf16.gmra.mxu0 %v682
    %v971 = vpop.f32.mrf.mxu0
    %v972 = vadd.f32 %v923, %v971
    %v973 = vpop.f32.mrf.mxu0
    %v974 = vadd.f32 %v925, %v973
    %975 = vmatmul.bf16.gmra.mxu0 %v685
    %v976 = vpop.f32.mrf.mxu0
    %v977 = vadd.f32 %v928, %v976
    %v978 = vpop.f32.mrf.mxu0
    %v979 = vadd.f32 %v930, %v978
    %980 = vdwg.mxu0
    %v981 = vmax.f32 %v746, 0.0
    %v982 = vmax.f32 %v844, 0.0
    %v983 = vmax.f32 %v942, 0.0
    %v984 = vmax.f32 %v748, 0.0
    %v985 = vmax.f32 %v846, 0.0
    %v986 = vmax.f32 %v944, 0.0
    %v987 = vmax.f32 %v751, 0.0
    %v988 = vmax.f32 %v849, 0.0
    %v989 = vmax.f32 %v947, 0.0
    %v990 = vmax.f32 %v753, 0.0
    %v991 = vmax.f32 %v851, 0.0
    %v992 = vmax.f32 %v949, 0.0
    %v993 = vmax.f32 %v756, 0.0
    %v994 = vmax.f32 %v854, 0.0
    %v995 = vmax.f32 %v952, 0.0
    %v996 = vmax.f32 %v758, 0.0
    %v997 = vmax.f32 %v856, 0.0
    %v998 = vmax.f32 %v954, 0.0
    %v999 = vmax.f32 %v761, 0.0
    %v1000 = vmax.f32 %v859, 0.0
    %v1001 = vmax.f32 %v957, 0.0
    %v1002 = vmax.f32 %v763, 0.0
    %v1003 = vmax.f32 %v861, 0.0
    %v1004 = vmax.f32 %v959, 0.0
    %v1005 = vmax.f32 %v766, 0.0
    %v1006 = vmax.f32 %v864, 0.0
    %v1007 = vmax.f32 %v962, 0.0
    %v1008 = vmax.f32 %v768, 0.0
    %v1009 = vmax.f32 %v866, 0.0
    %v1010 = vmax.f32 %v964, 0.0
    %v1011 = vmax.f32 %v771, 0.0
    %v1012 = vmax.f32 %v869, 0.0
    %v1013 = vmax.f32 %v967, 0.0
    %v1014 = vmax.f32 %v773, 0.0
    %v1015 = vmax.f32 %v871, 0.0
    %v1016 = vmax.f32 %v969, 0.0
    %v1017 = vmax.f32 %v776, 0.0
    %v1018 = vmax.f32 %v874, 0.0
    %v1019 = vmax.f32 %v972, 0.0
    %v1020 = vmax.f32 %v778, 0.0
    %v1021 = vmax.f32 %v876, 0.0
    %v1022 = vmax.f32 %v974, 0.0
    %v1023 = vmax.f32 %v781, 0.0
    %v1024 = vmax.f32 %v879, 0.0
    %v1025 = vmax.f32 %v977, 0.0
    %v1026 = vmax.f32 %v783, 0.0
    %v1027 = vmax.f32 %v881, 0.0
    %v1028 = vmax.f32 %v979, 0.0
    %v1029 = vld [vmem:[%s1] sm:$0xff]
    %v1030 = vld [vmem:[%s1 + $0x8] sm:$0xff]
    %v1031 = vld [vmem:[%s1 + $0x10] sm:$0xff]
    %v1032 = vld [vmem:[%s1 + $0x18] sm:$0xff]
    %v1033 = vld [vmem:[%s1 + $0x20] sm:$0xff]
    %v1034 = vld [vmem:[%s1 + $0x28] sm:$0xff]
    %v1035 = vmul.f32 %v981, %v1029
    %v1036 = vmul.f32 %v982, %v1030
    %v1037 = vmul.f32 %v983, %v1031
    %v1038 = vmul.f32 %v984, %v1032
    %v1039 = vmul.f32 %v985, %v1033
    %v1040 = vmul.f32 %v986, %v1034
    %v1041 = vmul.f32 %v987, %v1029
    %v1042 = vmul.f32 %v988, %v1030
    %v1043 = vmul.f32 %v989, %v1031
    %v1044 = vmul.f32 %v990, %v1032
    %v1045 = vmul.f32 %v991, %v1033
    %v1046 = vmul.f32 %v992, %v1034
    %v1047 = vmul.f32 %v993, %v1029
    %v1048 = vmul.f32 %v994, %v1030
    %v1049 = vmul.f32 %v995, %v1031
    %v1050 = vmul.f32 %v996, %v1032
    %v1051 = vmul.f32 %v997, %v1033
    %v1052 = vmul.f32 %v998, %v1034
    %v1053 = vmul.f32 %v999, %v1029
    %v1054 = vmul.f32 %v1000, %v1030
    %v1055 = vmul.f32 %v1001, %v1031
    %v1056 = vmul.f32 %v1002, %v1032
    %v1057 = vmul.f32 %v1003, %v1033
    %v1058 = vmul.f32 %v1004, %v1034
    %v1059 = vmul.f32 %v1005, %v1029
    %v1060 = vmul.f32 %v1006, %v1030
    %v1061 = vmul.f32 %v1007, %v1031
    %v1062 = vmul.f32 %v1008, %v1032
    %v1063 = vmul.f32 %v1009, %v1033
    %v1064 = vmul.f32 %v1010, %v1034
    %v1065 = vmul.f32 %v1011, %v1029
    %v1066 = vmul.f32 %v1012, %v1030
    %v1067 = vmul.f32 %v1013, %v1031
    %v1068 = vmul.f32 %v1014, %v1032
    %v1069 = vmul.f32 %v1015, %v1033
    %v1070 = vmul.f32 %v1016, %v1034
    %v1071 = vmul.f32 %v1017, %v1029
    %v1072 = vmul.f32 %v1018, %v1030
    %v1073 = vmul.f32 %v1019, %v1031
    %v1074 = vmul.f32 %v1020, %v1032
    %v1075 = vmul.f32 %v1021, %v1033
    %v1076 = vmul.f32 %v1022, %v1034
    %v1077 = vmul.f32 %v1023, %v1029
    %v1078 = vmul.f32 %v1024, %v1030
    %v1079 = vmul.f32 %v1025, %v1031
    %v1080 = vmul.f32 %v1026, %v1032
    %v1081 = vmul.f32 %v1027, %v1033
    %v1082 = vmul.f32 %v1028, %v1034
    %v1083 = vmax.f32 %v1035, %v1038
    %v1084 = vrot.slane %v1083, 4
    %v1085 = vmax.f32 %v1083, %v1084
    %v1086 = vrot.slane %v1085, 2
    %v1087 = vmax.f32 %v1085, %v1086
    %v1088 = vrot.slane %v1087, 1
    %v1089 = vmax.f32 %v1087, %v1088
    %v1090 = vmax.f32 %v1036, %v1039
    %v1091 = vrot.slane %v1090, 4
    %v1092 = vmax.f32 %v1090, %v1091
    %v1093 = vrot.slane %v1092, 2
    %v1094 = vmax.f32 %v1092, %v1093
    %v1095 = vrot.slane %v1094, 1
    %v1096 = vmax.f32 %v1094, %v1095
    %v1097 = vmax.f32 %v1037, %v1040
    %v1098 = vrot.slane %v1097, 4
    %v1099 = vmax.f32 %v1097, %v1098
    %v1100 = vrot.slane %v1099, 2
    %v1101 = vmax.f32 %v1099, %v1100
    %v1102 = vrot.slane %v1101, 1
    %v1103 = vmax.f32 %v1101, %v1102
    %v1104 = vmax.f32 %v1041, %v1044
    %v1105 = vrot.slane %v1104, 4
    %v1106 = vmax.f32 %v1104, %v1105
    %v1107 = vrot.slane %v1106, 2
    %v1108 = vmax.f32 %v1106, %v1107
    %v1109 = vrot.slane %v1108, 1
    %v1110 = vmax.f32 %v1108, %v1109
    %v1111 = vmax.f32 %v1042, %v1045
    %v1112 = vrot.slane %v1111, 4
    %v1113 = vmax.f32 %v1111, %v1112
    %v1114 = vrot.slane %v1113, 2
    %v1115 = vmax.f32 %v1113, %v1114
    %v1116 = vrot.slane %v1115, 1
    %v1117 = vmax.f32 %v1115, %v1116
    %v1118 = vmax.f32 %v1043, %v1046
    %v1119 = vrot.slane %v1118, 4
    %v1120 = vmax.f32 %v1118, %v1119
    %v1121 = vrot.slane %v1120, 2
    %v1122 = vmax.f32 %v1120, %v1121
    %v1123 = vrot.slane %v1122, 1
    %v1124 = vmax.f32 %v1122, %v1123
    %v1125 = vmax.f32 %v1047, %v1050
    %v1126 = vrot.slane %v1125, 4
    %v1127 = vmax.f32 %v1125, %v1126
    %v1128 = vrot.slane %v1127, 2
    %v1129 = vmax.f32 %v1127, %v1128
    %v1130 = vrot.slane %v1129, 1
    %v1131 = vmax.f32 %v1129, %v1130
    %v1132 = vmax.f32 %v1048, %v1051
    %v1133 = vrot.slane %v1132, 4
    %v1134 = vmax.f32 %v1132, %v1133
    %v1135 = vrot.slane %v1134, 2
    %v1136 = vmax.f32 %v1134, %v1135
    %v1137 = vrot.slane %v1136, 1
    %v1138 = vmax.f32 %v1136, %v1137
    %v1139 = vmax.f32 %v1049, %v1052
    %v1140 = vrot.slane %v1139, 4
    %v1141 = vmax.f32 %v1139, %v1140
    %v1142 = vrot.slane %v1141, 2
    %v1143 = vmax.f32 %v1141, %v1142
    %v1144 = vrot.slane %v1143, 1
    %v1145 = vmax.f32 %v1143, %v1144
    %v1146 = vmax.f32 %v1053, %v1056
    %v1147 = vrot.slane %v1146, 4
    %v1148 = vmax.f32 %v1146, %v1147
    %v1149 = vrot.slane %v1148, 2
    %v1150 = vmax.f32 %v1148, %v1149
    %v1151 = vrot.slane %v1150, 1
    %v1152 = vmax.f32 %v1150, %v1151
    %v1153 = vmax.f32 %v1054, %v1057
    %v1154 = vrot.slane %v1153, 4
    %v1155 = vmax.f32 %v1153, %v1154
    %v1156 = vrot.slane %v1155, 2
    %v1157 = vmax.f32 %v1155, %v1156
    %v1158 = vrot.slane %v1157, 1
    %v1159 = vmax.f32 %v1157, %v1158
    %v1160 = vmax.f32 %v1055, %v1058
    %v1161 = vrot.slane %v1160, 4
    %v1162 = vmax.f32 %v1160, %v1161
    %v1163 = vrot.slane %v1162, 2
    %v1164 = vmax.f32 %v1162, %v1163
    %v1165 = vrot.slane %v1164, 1
    %v1166 = vmax.f32 %v1164, %v1165
    %v1167 = vmax.f32 %v1059, %v1062
    %v1168 = vrot.slane %v1167, 4
    %v1169 = vmax.f32 %v1167, %v1168
    %v1170 = vrot.slane %v1169, 2
    %v1171 = vmax.f32 %v1169, %v1170
    %v1172 = vrot.slane %v1171, 1
    %v1173 = vmax.f32 %v1171, %v1172
    %v1174 = vmax.f32 %v1060, %v1063
    %v1175 = vrot.slane %v1174, 4
    %v1176 = vmax.f32 %v1174, %v1175
    %v1177 = vrot.slane %v1176, 2
    %v1178 = vmax.f32 %v1176, %v1177
    %v1179 = vrot.slane %v1178, 1
    %v1180 = vmax.f32 %v1178, %v1179
    %v1181 = vmax.f32 %v1061, %v1064
    %v1182 = vrot.slane %v1181, 4
    %v1183 = vmax.f32 %v1181, %v1182
    %v1184 = vrot.slane %v1183, 2
    %v1185 = vmax.f32 %v1183, %v1184
    %v1186 = vrot.slane %v1185, 1
    %v1187 = vmax.f32 %v1185, %v1186
    %v1188 = vmax.f32 %v1065, %v1068
    %v1189 = vrot.slane %v1188, 4
    %v1190 = vmax.f32 %v1188, %v1189
    %v1191 = vrot.slane %v1190, 2
    %v1192 = vmax.f32 %v1190, %v1191
    %v1193 = vrot.slane %v1192, 1
    %v1194 = vmax.f32 %v1192, %v1193
    %v1195 = vmax.f32 %v1066, %v1069
    %v1196 = vrot.slane %v1195, 4
    %v1197 = vmax.f32 %v1195, %v1196
    %v1198 = vrot.slane %v1197, 2
    %v1199 = vmax.f32 %v1197, %v1198
    %v1200 = vrot.slane %v1199, 1
    %v1201 = vmax.f32 %v1199, %v1200
    %v1202 = vmax.f32 %v1067, %v1070
    %v1203 = vrot.slane %v1202, 4
    %v1204 = vmax.f32 %v1202, %v1203
    %v1205 = vrot.slane %v1204, 2
    %v1206 = vmax.f32 %v1204, %v1205
    %v1207 = vrot.slane %v1206, 1
    %v1208 = vmax.f32 %v1206, %v1207
    %v1209 = vmax.f32 %v1071, %v1074
    %v1210 = vrot.slane %v1209, 4
    %v1211 = vmax.f32 %v1209, %v1210
    %v1212 = vrot.slane %v1211, 2
    %v1213 = vmax.f32 %v1211, %v1212
    %v1214 = vrot.slane %v1213, 1
    %v1215 = vmax.f32 %v1213, %v1214
    %v1216 = vmax.f32 %v1072, %v1075
    %v1217 = vrot.slane %v1216, 4
    %v1218 = vmax.f32 %v1216, %v1217
    %v1219 = vrot.slane %v1218, 2
    %v1220 = vmax.f32 %v1218, %v1219
    %v1221 = vrot.slane %v1220, 1
    %v1222 = vmax.f32 %v1220, %v1221
    %v1223 = vmax.f32 %v1073, %v1076
    %v1224 = vrot.slane %v1223, 4
    %v1225 = vmax.f32 %v1223, %v1224
    %v1226 = vrot.slane %v1225, 2
    %v1227 = vmax.f32 %v1225, %v1226
    %v1228 = vrot.slane %v1227, 1
    %v1229 = vmax.f32 %v1227, %v1228
    %v1230 = vmax.f32 %v1077, %v1080
    %v1231 = vrot.slane %v1230, 4
    %v1232 = vmax.f32 %v1230, %v1231
    %v1233 = vrot.slane %v1232, 2
    %v1234 = vmax.f32 %v1232, %v1233
    %v1235 = vrot.slane %v1234, 1
    %v1236 = vmax.f32 %v1234, %v1235
    %v1237 = vmax.f32 %v1078, %v1081
    %v1238 = vrot.slane %v1237, 4
    %v1239 = vmax.f32 %v1237, %v1238
    %v1240 = vrot.slane %v1239, 2
    %v1241 = vmax.f32 %v1239, %v1240
    %v1242 = vrot.slane %v1241, 1
    %v1243 = vmax.f32 %v1241, %v1242
    %v1244 = vmax.f32 %v1079, %v1082
    %v1245 = vrot.slane %v1244, 4
    %v1246 = vmax.f32 %v1244, %v1245
    %v1247 = vrot.slane %v1246, 2
    %v1248 = vmax.f32 %v1246, %v1247
    %v1249 = vrot.slane %v1248, 1
    %v1250 = vmax.f32 %v1248, %v1249
    %v1251 = vld [vmem:[%s4] sm:$0xff]
    %v1252 = vld [vmem:[%s4 + $0x8] sm:$0xff]
    %v1253 = vld [vmem:[%s4 + $0x10] sm:$0xff]
    %v1254 = vld [vmem:[%s4 + $0x18] sm:$0xff]
    %v1255 = vld [vmem:[%s4 + $0x20] sm:$0xff]
    %v1256 = vld [vmem:[%s4 + $0x28] sm:$0xff]
    %v1257 = vld [vmem:[%s4 + $0x30] sm:$0xff]
    %v1258 = vld [vmem:[%s4 + $0x38] sm:$0xff]
    %v1259 = vld [vmem:[%s4 + $0x40] sm:$0xff]
    %v1260 = vld [vmem:[%s4 + $0x48] sm:$0xff]
    %v1261 = vld [vmem:[%s4 + $0x50] sm:$0xff]
    %v1262 = vld [vmem:[%s4 + $0x58] sm:$0xff]
    %v1263 = vld [vmem:[%s4 + $0x60] sm:$0xff]
    %v1264 = vld [vmem:[%s4 + $0x68] sm:$0xff]
    %v1265 = vld [vmem:[%s4 + $0x70] sm:$0xff]
    %v1266 = vld [vmem:[%s4 + $0x78] sm:$0xff]
    %v1267 = vld [vmem:[%s4 + $0x80] sm:$0xff]
    %v1268 = vld [vmem:[%s4 + $0x88] sm:$0xff]
    %v1269 = vld [vmem:[%s4 + $0x90] sm:$0xff]
    %v1270 = vld [vmem:[%s4 + $0x98] sm:$0xff]
    %v1271 = vld [vmem:[%s4 + $0xa0] sm:$0xff]
    %v1272 = vld [vmem:[%s4 + $0xa8] sm:$0xff]
    %v1273 = vld [vmem:[%s4 + $0xb0] sm:$0xff]
    %v1274 = vld [vmem:[%s4 + $0xb8] sm:$0xff]
    %v1275 = vld [vmem:[%s4 + $0xc0] sm:$0xff]
    %v1276 = vld [vmem:[%s4 + $0xc8] sm:$0xff]
    %v1277 = vld [vmem:[%s4 + $0xd0] sm:$0xff]
    %v1278 = vld [vmem:[%s4 + $0xd8] sm:$0xff]
    %v1279 = vld [vmem:[%s4 + $0xe0] sm:$0xff]
    %v1280 = vld [vmem:[%s4 + $0xe8] sm:$0xff]
    %v1281 = vld [vmem:[%s4 + $0xf0] sm:$0xff]
    %v1282 = vld [vmem:[%s4 + $0xf8] sm:$0xff]
    %v1283 = vld [vmem:[%s4 + $0x100] sm:$0xff]
    %v1284 = vld [vmem:[%s4 + $0x108] sm:$0xff]
    %v1285 = vld [vmem:[%s4 + $0x110] sm:$0xff]
    %v1286 = vld [vmem:[%s4 + $0x118] sm:$0xff]
    %v1287 = vld [vmem:[%s4 + $0x120] sm:$0xff]
    %v1288 = vld [vmem:[%s4 + $0x128] sm:$0xff]
    %v1289 = vld [vmem:[%s4 + $0x130] sm:$0xff]
    %v1290 = vld [vmem:[%s4 + $0x138] sm:$0xff]
    %v1291 = vld [vmem:[%s4 + $0x140] sm:$0xff]
    %v1292 = vld [vmem:[%s4 + $0x148] sm:$0xff]
    %v1293 = vld [vmem:[%s4 + $0x150] sm:$0xff]
    %v1294 = vld [vmem:[%s4 + $0x158] sm:$0xff]
    %v1295 = vld [vmem:[%s4 + $0x160] sm:$0xff]
    %v1296 = vld [vmem:[%s4 + $0x168] sm:$0xff]
    %v1297 = vld [vmem:[%s4 + $0x170] sm:$0xff]
    %v1298 = vld [vmem:[%s4 + $0x178] sm:$0xff]
    %v1299 = vld [vmem:[%s5] sm:$0x1]
    %v1301 = vperm.slane %v1299, 0
    %vm1327 = vcmask 1041409
    %v1328 = vsel %vm1327, %v1110, %v1089
    %vm1329 = vcmask 1042434
    %v1330 = vsel %vm1329, %v1131, %v1328
    %vm1331 = vcmask 1043459
    %v1332 = vsel %vm1331, %v1152, %v1330
    %vm1333 = vcmask 1044484
    %v1334 = vsel %vm1333, %v1173, %v1332
    %vm1335 = vcmask 1045509
    %v1336 = vsel %vm1335, %v1194, %v1334
    %vm1337 = vcmask 1046534
    %v1338 = vsel %vm1337, %v1215, %v1336
    %vm1339 = vcmask 1047559
    %v1340 = vsel %vm1339, %v1236, %v1338
    %v1341 = vsel %vm1327, %v1117, %v1096
    %v1342 = vsel %vm1329, %v1138, %v1341
    %v1343 = vsel %vm1331, %v1159, %v1342
    %v1344 = vsel %vm1333, %v1180, %v1343
    %v1345 = vsel %vm1335, %v1201, %v1344
    %v1346 = vsel %vm1337, %v1222, %v1345
    %v1347 = vsel %vm1339, %v1243, %v1346
    %v1348 = vsel %vm1327, %v1124, %v1103
    %v1349 = vsel %vm1329, %v1145, %v1348
    %v1350 = vsel %vm1331, %v1166, %v1349
    %v1351 = vsel %vm1333, %v1187, %v1350
    %v1352 = vsel %vm1335, %v1208, %v1351
    %v1353 = vsel %vm1337, %v1229, %v1352
    %v1354 = vsel %vm1339, %v1250, %v1353
    %1358 = vmatpush.msra.mxu0 %v1266
    %1359 = vmatpush.msra.mxu0 %v1265
    %1360 = vmatpush.msra.mxu0 %v1264
    %1361 = vmatpush.msra.mxu0 %v1263
    %1362 = vmatpush.msra.mxu0 %v1262
    %1363 = vmatpush.msra.mxu0 %v1261
    %1364 = vmatpush.msra.mxu0 %v1260
    %1365 = vmatpush.msra.mxu0 %v1259
    %1366 = vmatpush.msra.mxu0 %v1258
    %1367 = vmatpush.msra.mxu0 %v1257
    %1368 = vmatpush.msra.mxu0 %v1256
    %1369 = vmatpush.msra.mxu0 %v1255
    %1370 = vmatpush.msra.mxu0 %v1254
    %1371 = vmatpush.msra.mxu0 %v1253
    %1372 = vmatpush.msra.mxu0 %v1252
    %1373 = vmatpush.msra.mxu0 %v1251
    %1374 = vmatmul.f32.gmra.mxu0 %v1340
    %v1375 = vpop.f32.mrf.mxu0
    %v1376 = vadd.f32 %v1301, %v1375
    %1377 = vdwg.mxu0
    %1378 = vmatpush.msra.mxu0 %v1282
    %1379 = vmatpush.msra.mxu0 %v1281
    %1380 = vmatpush.msra.mxu0 %v1280
    %1381 = vmatpush.msra.mxu0 %v1279
    %1382 = vmatpush.msra.mxu0 %v1278
    %1383 = vmatpush.msra.mxu0 %v1277
    %1384 = vmatpush.msra.mxu0 %v1276
    %1385 = vmatpush.msra.mxu0 %v1275
    %1386 = vmatpush.msra.mxu0 %v1274
    %1387 = vmatpush.msra.mxu0 %v1273
    %1388 = vmatpush.msra.mxu0 %v1272
    %1389 = vmatpush.msra.mxu0 %v1271
    %1390 = vmatpush.msra.mxu0 %v1270
    %1391 = vmatpush.msra.mxu0 %v1269
    %1392 = vmatpush.msra.mxu0 %v1268
    %1393 = vmatpush.msra.mxu0 %v1267
    %1394 = vmatmul.f32.gmra.mxu0 %v1347
    %v1395 = vpop.f32.mrf.mxu0
    %v1396 = vadd.f32 %v1376, %v1395
    %1397 = vdwg.mxu0
    %1398 = vmatpush.msra.mxu0 %v1298
    %1399 = vmatpush.msra.mxu0 %v1297
    %1400 = vmatpush.msra.mxu0 %v1296
    %1401 = vmatpush.msra.mxu0 %v1295
    %1402 = vmatpush.msra.mxu0 %v1294
    %1403 = vmatpush.msra.mxu0 %v1293
    %1404 = vmatpush.msra.mxu0 %v1292
    %1405 = vmatpush.msra.mxu0 %v1291
    %1406 = vmatpush.msra.mxu0 %v1290
    %1407 = vmatpush.msra.mxu0 %v1289
    %1408 = vmatpush.msra.mxu0 %v1288
    %1409 = vmatpush.msra.mxu0 %v1287
    %1410 = vmatpush.msra.mxu0 %v1286
    %1411 = vmatpush.msra.mxu0 %v1285
    %1412 = vmatpush.msra.mxu0 %v1284
    %1413 = vmatpush.msra.mxu0 %v1283
    %1414 = vmatmul.f32.gmra.mxu0 %v1354
    %v1415 = vpop.f32.mrf.mxu0
    %v1416 = vadd.f32 %v1396, %v1415
    %1417 = vdwg.mxu0
    %1418 = vst [vmem:[%s6] sm:$0xff] %v1416
    // Predicated region
    $region30: #{cnn_static_forward.1} parent=1 // pred_check
      _
    $region31: #{cnn_static_forward.1} parent=1 // pred_check_branch
      %1420 = sbr.rel (0) target = $region33
    $region32: #{cnn_static_forward.1} parent=1 // pred_region
      _
    $region33: #{cnn_static_forward.1} parent=1 // pred_fallthru
      _
    // Predicated region
    $region34: #{cnn_static_forward.1} parent=1 // pred_check
      _
    $region35: #{cnn_static_forward.1} parent=1 // pred_check_branch
      %1422 = sbr.rel (0) target = $region37
    $region36: #{cnn_static_forward.1} parent=1 // pred_region
      _
    $region37: #{cnn_static_forward.1} parent=1 // pred_fallthru
      _
    %1423 = vsyncpa [#allocation3], 1

</llo_original>
